<compile_context>
chip_gen: v5e
topology: v5e:2x2
jax: 0.10.0
libtpu: 0.0.40
codegen_flags: <defaults>
</compile_context>

<pallas_src>
import functools

import jax
import jax.numpy as jnp
from jax.experimental import pallas as pl
from jax.experimental.pallas import tpu as pltpu


def _dmin_kernel(mw_ref, vw_ref, x_ref, w_ref, b_ref, o_ref, *, eps, num_channels):
    # x_ref block: (Bt, C, N); Bt batch elements per grid step.
    x = x_ref[...].astype(jnp.float32)                       # (Bt, C, N)
    c = float(num_channels)

    # per-position ("instance") stats over channels (sublane-axis reduction);
    # torch.var default is unbiased -> divide by (C - 1).
    mean_in = jnp.mean(x, axis=1, keepdims=True)             # (Bt, 1, N)
    diff = x - mean_in
    var_in = jnp.sum(diff * diff, axis=1, keepdims=True) / (c - 1.0)

    # "layer" stats over positions (lane-axis reduction)
    mean_ln = jnp.mean(mean_in, axis=2, keepdims=True)       # (Bt, 1, 1)
    temp = var_in + mean_in * mean_in
    var_ln = jnp.mean(temp, axis=2, keepdims=True) - mean_ln * mean_ln

    # softmax-mixed statistics (softmaxes themselves are 2-scalar wrapper glue)
    mw0 = mw_ref[0]
    mw1 = mw_ref[1]
    vw0 = vw_ref[0]
    vw1 = vw_ref[1]
    mean = mw0 * mean_in + mw1 * mean_ln                     # (Bt, 1, N)
    var = vw0 * var_in + vw1 * var_ln                        # (Bt, 1, N)

    # rsqrt goes to the EUP slot (frees the VALU divide)
    inv_std = jax.lax.rsqrt(var + eps)
    y = (x - mean) * inv_std                                 # (Bt, C, N)

    # weight/bias are (1, 1, N): per-position scale/shift along the lane axis,
    # exactly the (1, F, 1) broadcast of the PyTorch reference (F == N).
    y = y * w_ref[...] + b_ref[...]
    o_ref[...] = y.astype(o_ref.dtype)


def _choose_batch_tile(B, C, N):
    """Pick how many batch elements to process per grid step."""
    per_batch_bytes = C * N * 4
    # keep (double-buffered in + out) per step under ~8 MiB (safe on v5e/v7x)
    budget = 8 << 20
    max_bt = max(1, budget // (4 * per_batch_bytes))
    bt = 1
    for cand in range(min(B, max_bt), 0, -1):
        if B % cand == 0:
            bt = cand
            break
    # keep >= 2 parallel grid steps when the batch allows it (v7x has 2 TCs)
    if bt == B and B > 1:
        for cand in range(B // 2, 0, -1):
            if B % cand == 0:
                bt = cand
                break
    return bt


def dmin_forward(x, weight, bias, mean_weight, var_weight, eps=1e-5):
    """x: (B, C, N) -> (B, C, N). No layout transposes: kernel runs in (B, C, N)."""
    B, C, N = x.shape
    F = weight.shape[1]
    assert F == N, "reference broadcast (1,F,1) * (B,N,C) requires num_features == N"

    # glue: reshape params to lane-dense rows, 2-element softmaxes
    w_row = weight.reshape(1, 1, F).astype(jnp.float32)       # (1, 1, N)
    b_row = bias.reshape(1, 1, F).astype(jnp.float32)         # (1, 1, N)
    mw = jax.nn.softmax(mean_weight.astype(jnp.float32))      # (2,)
    vw = jax.nn.softmax(var_weight.astype(jnp.float32))       # (2,)

    Bt = _choose_batch_tile(B, C, N)
    grid = (B // Bt,)

    kernel = functools.partial(_dmin_kernel, eps=float(eps), num_channels=C)

    # Only raise the scoped-VMEM limit if the blocks actually need it
    # (v5e default scoped limit is 16 MiB; v7x has 64 MiB physical VMEM).
    block_bytes = Bt * C * N * x.dtype.itemsize
    vmem_need = 4 * block_bytes + 4 * N * 4 + (1 << 20)
    vmem_limit = int(min(vmem_need, 100 << 20)) if vmem_need > (16 << 20) else None

    itemsize = x.dtype.itemsize
    cost = pl.CostEstimate(
        flops=8 * B * C * N,
        transcendentals=B * N,
        bytes_accessed=2 * B * C * N * itemsize + 2 * N * 4 + 16,
    )

    out = pl.pallas_call(
        kernel,
        out_shape=jax.ShapeDtypeStruct((B, C, N), x.dtype),
        grid=grid,
        in_specs=[
            pl.BlockSpec(memory_space=pltpu.MemorySpace.SMEM),   # softmax(mean_weight)
            pl.BlockSpec(memory_space=pltpu.MemorySpace.SMEM),   # softmax(var_weight)
            pl.BlockSpec((Bt, C, N), lambda b: (b, 0, 0)),       # x (B, C, N)
            pl.BlockSpec((1, 1, N), lambda b: (0, 0, 0)),        # weight row
            pl.BlockSpec((1, 1, N), lambda b: (0, 0, 0)),        # bias row
        ],
        out_specs=pl.BlockSpec((Bt, C, N), lambda b: (b, 0, 0)),
        compiler_params=pltpu.CompilerParams(
            dimension_semantics=("parallel",),
            vmem_limit_bytes=vmem_limit,
        ),
        cost_estimate=cost,
    )(mw, vw, x, w_row, b_row)

    return out


def dmin_reference(x, weight, bias, mean_weight, var_weight, eps=1e-5):
    """Pure-JAX line-by-line transcription of the PyTorch forward."""
    xt = jnp.transpose(x, (0, 2, 1))                       # b c n -> b n c
    mean_in = jnp.mean(xt, axis=-1, keepdims=True)
    var_in = jnp.var(xt, axis=-1, keepdims=True, ddof=1)   # torch default: unbiased
    mean_ln = jnp.mean(mean_in, axis=1, keepdims=True)
    temp = var_in + mean_in ** 2
    var_ln = jnp.mean(temp, axis=1, keepdims=True) - mean_ln ** 2
    mw = jax.nn.softmax(mean_weight, axis=0)
    vw = jax.nn.softmax(var_weight, axis=0)
    mean = mw[0] * mean_in + mw[1] * mean_ln
    var = vw[0] * var_in + vw[1] * var_ln
    y = (xt - mean) / jnp.sqrt(var + eps)
    y = y * weight + bias                                   # (1, F, 1) broadcast
    return jnp.transpose(y, (0, 2, 1))                      # b n c -> b c n


if __name__ == "__main__":
    B, C, N = 2, 32, 32          # num_features == N (required by reference broadcast)
    eps = 1e-5

    key = jax.random.PRNGKey(0)
    kx, kw, kb, kmw, kvw = jax.random.split(key, 5)
    x = jax.random.normal(kx, (B, C, N), dtype=jnp.float32)

    # Deterministic parameter init (shapes per DMIN.__init__); randomized so the
    # affine/mixing paths are actually exercised.
    weight = 1.0 + 0.1 * jax.random.normal(kw, (1, N, 1), dtype=jnp.float32)
    bias = 0.1 * jax.random.normal(kb, (1, N, 1), dtype=jnp.float32)
    mean_weight = jax.random.normal(kmw, (2,), dtype=jnp.float32)
    var_weight = jax.random.normal(kvw, (2,), dtype=jnp.float32)

    out = dmin_forward(x, weight, bias, mean_weight, var_weight, eps=eps)
    out = jax.block_until_ready(out)

    ref = dmin_reference(x, weight, bias, mean_weight, var_weight, eps=eps)
    assert out.shape == (B, C, N)
    assert jnp.allclose(out, ref, rtol=1e-5, atol=1e-5), "mismatch vs reference"

    print("KERNEL_OK")
</pallas_src>

<mosaic_0001>
module attributes {stable_mosaic.version = 11 : i64} {
  func.func @_dmin_kernel(%arg0: i32, %arg1: memref<2xf32, #tpu.memory_space<smem>>, %arg2: memref<2xf32, #tpu.memory_space<smem>>, %arg3: memref<1x32x32xf32, #tpu.memory_space<vmem>>, %arg4: memref<1x1x32xf32, #tpu.memory_space<vmem>>, %arg5: memref<1x1x32xf32, #tpu.memory_space<vmem>>, %arg6: memref<1x32x32xf32, #tpu.memory_space<vmem>>) attributes {dimension_semantics = [#tpu.dimension_semantics<parallel>], iteration_bounds = array<i64: 2>, scalar_prefetch = 0 : i64, scratch_operands = 0 : i64, tpu.core_type = #tpu.core_type<tc>, window_params = [{transform_indices = @transform_0, window_bounds = array<i64: 2>}, {transform_indices = @transform_1, window_bounds = array<i64: 2>}, {transform_indices = @transform_2, window_bounds = array<i64: 1, 32, 32>}, {pipeline_mode = #tpu.pipeline_mode<synchronous>, transform_indices = @transform_3, window_bounds = array<i64: 1, 1, 32>}, {pipeline_mode = #tpu.pipeline_mode<synchronous>, transform_indices = @transform_4, window_bounds = array<i64: 1, 1, 32>}, {transform_indices = @transform_5, window_bounds = array<i64: 1, 32, 32>}]} {
    %c0 = arith.constant 0 : index
    %c0_0 = arith.constant 0 : index
    %c0_1 = arith.constant 0 : index
    %0 = vector.load %arg3[%c0, %c0_0, %c0_1] : memref<1x32x32xf32, #tpu.memory_space<vmem>>, vector<1x32x32xf32>
    %cst = arith.constant dense<0.000000e+00> : vector<1x32xf32>
    %1 = vector.multi_reduction <add>, %0, %cst [1] : vector<1x32x32xf32> to vector<1x32xf32>
    %2 = vector.shape_cast %1 : vector<1x32xf32> to vector<1x1x32xf32>
    %cst_2 = arith.constant 3.200000e+01 : f32
    %3 = vector.broadcast %cst_2 : f32 to vector<1x1x32xf32>
    %4 = arith.divf %2, %3 : vector<1x1x32xf32>
    %5 = vector.broadcast %4 : vector<1x1x32xf32> to vector<1x32x32xf32>
    %6 = arith.subf %0, %5 : vector<1x32x32xf32>
    %7 = arith.mulf %6, %6 : vector<1x32x32xf32>
    %cst_3 = arith.constant dense<0.000000e+00> : vector<1x32xf32>
    %8 = vector.multi_reduction <add>, %7, %cst_3 [1] : vector<1x32x32xf32> to vector<1x32xf32>
    %9 = vector.shape_cast %8 : vector<1x32xf32> to vector<1x1x32xf32>
    %cst_4 = arith.constant 3.100000e+01 : f32
    %10 = vector.broadcast %cst_4 : f32 to vector<1x1x32xf32>
    %11 = arith.divf %9, %10 : vector<1x1x32xf32>
    %cst_5 = arith.constant dense<0.000000e+00> : vector<1x1xf32>
    %12 = vector.multi_reduction <add>, %4, %cst_5 [2] : vector<1x1x32xf32> to vector<1x1xf32>
    %13 = vector.shape_cast %12 : vector<1x1xf32> to vector<1x1x1xf32>
    %cst_6 = arith.constant 3.200000e+01 : f32
    %14 = vector.broadcast %cst_6 : f32 to vector<1x1x1xf32>
    %15 = arith.divf %13, %14 : vector<1x1x1xf32>
    %16 = arith.mulf %4, %4 : vector<1x1x32xf32>
    %17 = arith.addf %11, %16 : vector<1x1x32xf32>
    %cst_7 = arith.constant dense<0.000000e+00> : vector<1x1xf32>
    %18 = vector.multi_reduction <add>, %17, %cst_7 [2] : vector<1x1x32xf32> to vector<1x1xf32>
    %19 = vector.shape_cast %18 : vector<1x1xf32> to vector<1x1x1xf32>
    %cst_8 = arith.constant 3.200000e+01 : f32
    %20 = vector.broadcast %cst_8 : f32 to vector<1x1x1xf32>
    %21 = arith.divf %19, %20 : vector<1x1x1xf32>
    %22 = arith.mulf %15, %15 : vector<1x1x1xf32>
    %23 = arith.subf %21, %22 : vector<1x1x1xf32>
    %c0_9 = arith.constant 0 : index
    %24 = memref.load %arg1[%c0_9] : memref<2xf32, #tpu.memory_space<smem>>
    %c1 = arith.constant 1 : index
    %25 = memref.load %arg1[%c1] : memref<2xf32, #tpu.memory_space<smem>>
    %c0_10 = arith.constant 0 : index
    %26 = memref.load %arg2[%c0_10] : memref<2xf32, #tpu.memory_space<smem>>
    %c1_11 = arith.constant 1 : index
    %27 = memref.load %arg2[%c1_11] : memref<2xf32, #tpu.memory_space<smem>>
    %28 = vector.broadcast %24 : f32 to vector<1x1x32xf32>
    %29 = arith.mulf %28, %4 : vector<1x1x32xf32>
    %30 = vector.broadcast %25 : f32 to vector<1x1x1xf32>
    %31 = arith.mulf %30, %15 : vector<1x1x1xf32>
    %32 = vector.broadcast %31 : vector<1x1x1xf32> to vector<1x1x32xf32>
    %33 = arith.addf %29, %32 : vector<1x1x32xf32>
    %34 = vector.broadcast %26 : f32 to vector<1x1x32xf32>
    %35 = arith.mulf %34, %11 : vector<1x1x32xf32>
    %36 = vector.broadcast %27 : f32 to vector<1x1x1xf32>
    %37 = arith.mulf %36, %23 : vector<1x1x1xf32>
    %38 = vector.broadcast %37 : vector<1x1x1xf32> to vector<1x1x32xf32>
    %39 = arith.addf %35, %38 : vector<1x1x32xf32>
    %cst_12 = arith.constant 9.99999974E-6 : f32
    %40 = vector.broadcast %cst_12 : f32 to vector<1x1x32xf32>
    %41 = arith.addf %39, %40 : vector<1x1x32xf32>
    %42 = math.rsqrt %41 : vector<1x1x32xf32>
    %43 = vector.broadcast %33 : vector<1x1x32xf32> to vector<1x32x32xf32>
    %44 = arith.subf %0, %43 : vector<1x32x32xf32>
    %45 = vector.broadcast %42 : vector<1x1x32xf32> to vector<1x32x32xf32>
    %46 = arith.mulf %44, %45 : vector<1x32x32xf32>
    %c0_13 = arith.constant 0 : index
    %c0_14 = arith.constant 0 : index
    %c0_15 = arith.constant 0 : index
    %47 = vector.load %arg4[%c0_13, %c0_14, %c0_15] : memref<1x1x32xf32, #tpu.memory_space<vmem>>, vector<1x1x32xf32>
    %48 = vector.broadcast %47 : vector<1x1x32xf32> to vector<1x32x32xf32>
    %49 = arith.mulf %46, %48 : vector<1x32x32xf32>
    %c0_16 = arith.constant 0 : index
    %c0_17 = arith.constant 0 : index
    %c0_18 = arith.constant 0 : index
    %50 = vector.load %arg5[%c0_16, %c0_17, %c0_18] : memref<1x1x32xf32, #tpu.memory_space<vmem>>, vector<1x1x32xf32>
    %51 = vector.broadcast %50 : vector<1x1x32xf32> to vector<1x32x32xf32>
    %52 = arith.addf %49, %51 : vector<1x32x32xf32>
    %c0_19 = arith.constant 0 : index
    %c0_20 = arith.constant 0 : index
    %c0_21 = arith.constant 0 : index
    %53 = vector.load %arg6[%c0_19, %c0_20, %c0_21] : memref<1x32x32xf32, #tpu.memory_space<vmem>>, vector<1x32x32xf32>
    tpu.vector_store %arg6[%c0_19, %c0_20, %c0_21], %52 {strides = array<i32>} : memref<1x32x32xf32, #tpu.memory_space<vmem>>, vector<1x32x32xf32>,
    return
  }
  func.func @transform_0(%arg0: i32) -> i32 {
    %c0_i32 = arith.constant 0 : i32
    %c0_i32_0 = arith.constant 0 : i32
    return %c0_i32 : i32
  }
  func.func @transform_1(%arg0: i32) -> i32 {
    %c0_i32 = arith.constant 0 : i32
    %c0_i32_0 = arith.constant 0 : i32
    return %c0_i32 : i32
  }
  func.func @transform_2(%arg0: i32) -> (i32, i32, i32) {
    %c0_i32 = arith.constant 0 : i32
    %c0_i32_0 = arith.constant 0 : i32
    %c0_i32_1 = arith.constant 0 : i32
    return %arg0, %c0_i32, %c0_i32_0 : i32, i32, i32
  }
  func.func @transform_3(%arg0: i32) -> (i32, i32, i32) {
    %c0_i32 = arith.constant 0 : i32
    %c0_i32_0 = arith.constant 0 : i32
    %c0_i32_1 = arith.constant 0 : i32
    %c0_i32_2 = arith.constant 0 : i32
    return %c0_i32, %c0_i32_0, %c0_i32_1 : i32, i32, i32
  }
  func.func @transform_4(%arg0: i32) -> (i32, i32, i32) {
    %c0_i32 = arith.constant 0 : i32
    %c0_i32_0 = arith.constant 0 : i32
    %c0_i32_1 = arith.constant 0 : i32
    %c0_i32_2 = arith.constant 0 : i32
    return %c0_i32, %c0_i32_0, %c0_i32_1 : i32, i32, i32
  }
  func.func @transform_5(%arg0: i32) -> (i32, i32, i32) {
    %c0_i32 = arith.constant 0 : i32
    %c0_i32_0 = arith.constant 0 : i32
    %c0_i32_1 = arith.constant 0 : i32
    return %arg0, %c0_i32, %c0_i32_0 : i32, i32, i32
  }
}

</mosaic_0001>

<llo_original>
// kernel: tpu_custom_call.1
$region0: #{tpu_custom_call.1}
  #allocation0 [shape = 'u32[]', space=smem, size = 0x4, offset = 0x4, fixed_abs, tag = 'smem constant byte address 0x4 - core index']
  #allocation1 [shape = 'u32[72,128]{1,0:T(1,128)}', space=vmem, size = 0x9000, scoped, tag = 'internal scratch']
  %s0 = inlined_call_operand.hbm [shape: f32[2], index: 0, kind: input, shape index: {}]
  %s1 = inlined_call_operand.hbm [shape: f32[2], index: 1, kind: input, shape index: {}]
  %s2 = inlined_call_operand.hbm [shape: f32[2,32,32], index: 2, kind: input, shape index: {}]
  %s3 = inlined_call_operand.vmem [shape: f32[1,1,32], index: 3, kind: input, shape index: {}]
  %s4 = inlined_call_operand.vmem [shape: f32[1,1,32], index: 4, kind: input, shape index: {}]
  %s5 = inlined_call_operand.hbm [shape: f32[2,32,32], index: 5, kind: output, shape index: {}]
  %s6 = sld [smem:[#allocation0]]
  $region65: #{tpu_custom_call.1} parent=0
    _
  %s8 = ssub.s32 1, %s6
  %s9 = scalar_select 0, %s8, %s6
  $region1: #{tpu_custom_call.1} parent=0
    #allocation2 [shape = 'u8[512]{0}', space=smem, size = 0x200, scoped, tag = 'input window, operand 0, single buffered']
    #allocation3 [shape = 's32[2]{0}', space=sflag, size = 0x8, scoped, tag = 'scoped memory for tpu_custom_call.1']
    #allocation4 [shape = 's32[2]{0}', space=sflag, size = 0x8, scoped, tag = 'scoped memory for tpu_custom_call.1']
    #allocation5 [shape = 's32[2]{0}', space=sflag, size = 0x8, scoped, tag = 'scoped memory for tpu_custom_call.1']
    #allocation6 [shape = 'u8[512]{0}', space=smem, size = 0x200, scoped, tag = 'input window, operand 1, single buffered']
    #allocation7 [shape = 's32[1]{0}', space=sflag, size = 0x4, scoped, tag = 'scoped memory for tpu_custom_call.1']
    #allocation8 [shape = 'u8[32768]{0}', space=vmem, size = 0x8000, scoped, tag = 'input window, operand 2']
    #allocation9 [shape = 'u8[32768]{0}', space=vmem, size = 0x8000, scoped, tag = 'output window, operand 0']
    %10 = vsyncpa [#allocation5], 0
    %11 = vsyncpa [#allocation7], 0
    %12 = vsyncpa [#allocation3], 0
    %s13 = scalar_lea.sflag [#allocation3], 1
    %14 = vsyncpa %s13, 0
    %15 = vsyncpa [#allocation4], 0
    %s16 = scalar_lea.sflag [#allocation4], 1
    %17 = vsyncpa %s16, 0
    loop: start=0, step=1, limit=4
    $region2: #{tpu_custom_call.1} parent=1 // loop_pre_header
      _
    $region3: #{tpu_custom_call.1} parent=1 // loop_header
      %s19 = sphi 0, %s23
      %p20 = scmp.ge.s32.totalorder %s19, 4
      %s27 = sphi 0, %s27
      %s29 = sphi 0, %s27
      %s30 = sphi 0, %s29
      %s44 = sphi 0, %s30
      %s48 = sphi 0, %s48
      %s50 = sphi 0, %s48
      %s51 = sphi 0, %s50
      %s65 = sphi 0, %s51
      %s71 = sphi 0, %s73
      %s74 = sphi 0, %s71
      %s75 = sphi 0, %s74
      %s91 = sphi 0, %s75
      %s95 = sphi 0, %s95
      %s97 = sphi 0, %s95
      %s98 = sphi 0, %s97
      %s112 = sphi 0, %s98
      %s116 = sphi 0, %s116
      %s118 = sphi 0, %s116
      %s119 = sphi 0, %s118
      %s133 = sphi 0, %s119
      %s139 = sphi 0, %s141
      %s142 = sphi 0, %s139
      %s143 = sphi 0, %s142
      %s159 = sphi 0, %s143
    $region4: #{tpu_custom_call.1} parent=1 // loop_header_branch
      %22 = sbr.rel (%p20) target = $region8
    $region5: #{tpu_custom_call.1} parent=1 // loop_body
      %s24 = ssub.s32 %s19, 1
      %s25 = ssub.s32 %s19, 2
      %s26 = sadd.s32 %s19, 1
      %s28 = sadd.s32 %s27, 1
      %p31 = scmp.eq.s32.totalorder %s19, 1
      %p32 = scmp.ne.s32.totalorder %s27, %s29
      %p33 = scmp.eq.s32.totalorder %s19, 0
      %p34 = por %p32, %p33
      %p35 = scmp.ne.s32.totalorder %s27, %s29
      %p36 = scmp.eq.s32.totalorder %s24, 1
      %p37 = por %p35, %p36
      %p38 = scmp.ne.s32.totalorder %s29, %s30
      %p39 = scmp.eq.s32.totalorder %s24, 0
      %p40 = por %p38, %p39
      %p41 = scmp.ne.s32.totalorder %s29, %s30
      %p42 = scmp.eq.s32.totalorder %s25, 1
      %p43 = por %p41, %p42
      %p45 = scmp.ne.s32.totalorder %s30, %s44
      %p46 = scmp.eq.s32.totalorder %s25, 0
      %p47 = por %p45, %p46
      %s49 = sadd.s32 %s48, 1
      %p52 = scmp.eq.s32.totalorder %s19, 1
      %p53 = scmp.ne.s32.totalorder %s48, %s50
      %p54 = scmp.eq.s32.totalorder %s19, 0
      %p55 = por %p53, %p54
      %p56 = scmp.ne.s32.totalorder %s48, %s50
      %p57 = scmp.eq.s32.totalorder %s24, 1
      %p58 = por %p56, %p57
      %p59 = scmp.ne.s32.totalorder %s50, %s51
      %p60 = scmp.eq.s32.totalorder %s24, 0
      %p61 = por %p59, %p60
      %p62 = scmp.ne.s32.totalorder %s50, %s51
      %p63 = scmp.eq.s32.totalorder %s25, 1
      %p64 = por %p62, %p63
      %p66 = scmp.ne.s32.totalorder %s51, %s65
      %p67 = scmp.eq.s32.totalorder %s25, 0
      %p68 = por %p66, %p67
      %s69 = ssub.s32 %s19, %s26
      %p70 = scmp.eq.s32.totalorder %s69, 0
      %s72 = sadd.s32 %s71, 1
      %s73 = scalar_select %p70, %s71, %s72
      %p76 = pneg %p70
      %p77 = scmp.eq.s32.totalorder %s19, 1
      %p78 = por %p76, %p77
      %p79 = scmp.ne.s32.totalorder %s71, %s74
      %p80 = scmp.eq.s32.totalorder %s19, 0
      %p81 = por %p79, %p80
      %p82 = scmp.ne.s32.totalorder %s71, %s74
      %p83 = scmp.eq.s32.totalorder %s24, 1
      %p84 = por %p82, %p83
      %p85 = scmp.ne.s32.totalorder %s74, %s75
      %p86 = scmp.eq.s32.totalorder %s24, 0
      %p87 = por %p85, %p86
      %p88 = scmp.ne.s32.totalorder %s74, %s75
      %p89 = scmp.eq.s32.totalorder %s25, 1
      %p90 = por %p88, %p89
      %p92 = scmp.ne.s32.totalorder %s75, %s91
      %p93 = scmp.eq.s32.totalorder %s25, 0
      %p94 = por %p92, %p93
      %s96 = sadd.s32 %s95, 1
      %p99 = scmp.eq.s32.totalorder %s19, 1
      %p100 = scmp.ne.s32.totalorder %s95, %s97
      %p101 = scmp.eq.s32.totalorder %s19, 0
      %p102 = por %p100, %p101
      %p103 = scmp.ne.s32.totalorder %s95, %s97
      %p104 = scmp.eq.s32.totalorder %s24, 1
      %p105 = por %p103, %p104
      %p106 = scmp.ne.s32.totalorder %s97, %s98
      %p107 = scmp.eq.s32.totalorder %s24, 0
      %p108 = por %p106, %p107
      %p109 = scmp.ne.s32.totalorder %s97, %s98
      %p110 = scmp.eq.s32.totalorder %s25, 1
      %p111 = por %p109, %p110
      %p113 = scmp.ne.s32.totalorder %s98, %s112
      %p114 = scmp.eq.s32.totalorder %s25, 0
      %p115 = por %p113, %p114
      %s117 = sadd.s32 %s116, 1
      %p120 = scmp.eq.s32.totalorder %s19, 1
      %p121 = scmp.ne.s32.totalorder %s116, %s118
      %p122 = scmp.eq.s32.totalorder %s19, 0
      %p123 = por %p121, %p122
      %p124 = scmp.ne.s32.totalorder %s116, %s118
      %p125 = scmp.eq.s32.totalorder %s24, 1
      %p126 = por %p124, %p125
      %p127 = scmp.ne.s32.totalorder %s118, %s119
      %p128 = scmp.eq.s32.totalorder %s24, 0
      %p129 = por %p127, %p128
      %p130 = scmp.ne.s32.totalorder %s118, %s119
      %p131 = scmp.eq.s32.totalorder %s25, 1
      %p132 = por %p130, %p131
      %p134 = scmp.ne.s32.totalorder %s119, %s133
      %p135 = scmp.eq.s32.totalorder %s25, 0
      %p136 = por %p134, %p135
      %s137 = ssub.s32 %s19, %s26
      %p138 = scmp.eq.s32.totalorder %s137, 0
      %s140 = sadd.s32 %s139, 1
      %s141 = scalar_select %p138, %s139, %s140
      %p144 = pneg %p138
      %p145 = scmp.eq.s32.totalorder %s19, 1
      %p146 = por %p144, %p145
      %p147 = scmp.ne.s32.totalorder %s139, %s142
      %p148 = scmp.eq.s32.totalorder %s19, 0
      %p149 = por %p147, %p148
      %p150 = scmp.ne.s32.totalorder %s139, %s142
      %p151 = scmp.eq.s32.totalorder %s24, 1
      %p152 = por %p150, %p151
      %p153 = scmp.ne.s32.totalorder %s142, %s143
      %p154 = scmp.eq.s32.totalorder %s24, 0
      %p155 = por %p153, %p154
      %p156 = scmp.ne.s32.totalorder %s142, %s143
      %p157 = scmp.eq.s32.totalorder %s25, 1
      %p158 = por %p156, %p157
      %p160 = scmp.ne.s32.totalorder %s143, %s159
      %p161 = scmp.eq.s32.totalorder %s25, 0
      %p162 = por %p160, %p161
      %p163 = scmp.le.s32.totalorder 1, %s19
      %p164 = scmp.lt.s32.totalorder %s19, 3
      %p165 = pnand %p163, %p164
      %p166 = pneg %p165
      // Predicated region
      $region9: #{tpu_custom_call.1} parent=5 // pred_check
        _
      $region10: #{tpu_custom_call.1} parent=5 // pred_check_branch
        %168 = sbr.rel (%p165) target = $region12
      $region11: #{tpu_custom_call.1} parent=5 // pred_region
        %s169 = ssub.s32 %s19, 1
        // Predicated region
        $region13: #{tpu_custom_call.1} parent=11 // pred_check
          %p170 = pneg %p40
        $region14: #{tpu_custom_call.1} parent=11 // pred_check_branch
          %172 = sbr.rel (%p170) target = $region16
        $region15: #{tpu_custom_call.1} parent=11 // pred_region
          %174 = vsyncadd [#allocation5], 0
          %s176 = sshll.u32 %s0, 4
          %s177 = int_to_ptr.hbm [resolvable:$true] %s176
          %179 = dma.hbm_to_smem %s177, 16, [#allocation2], [#allocation5]
        $region16: #{tpu_custom_call.1} parent=11 // pred_fallthru
          _
        // Predicated region
        $region17: #{tpu_custom_call.1} parent=11 // pred_check
          %p180 = pneg %p61
        $region18: #{tpu_custom_call.1} parent=11 // pred_check_branch
          %182 = sbr.rel (%p180) target = $region20
        $region19: #{tpu_custom_call.1} parent=11 // pred_region
          %184 = vsyncadd [#allocation7], 0
          %s186 = sshll.u32 %s1, 4
          %s187 = int_to_ptr.hbm [resolvable:$true] %s186
          %189 = dma.hbm_to_smem %s187, 16, [#allocation6], [#allocation7]
        $region20: #{tpu_custom_call.1} parent=11 // pred_fallthru
          _
        // Predicated region
        $region21: #{tpu_custom_call.1} parent=11 // pred_check
          %p190 = pneg %p108
        $region22: #{tpu_custom_call.1} parent=11 // pred_check_branch
          %192 = sbr.rel (%p190) target = $region24
        $region23: #{tpu_custom_call.1} parent=11 // pred_region
          _
        $region24: #{tpu_custom_call.1} parent=11 // pred_fallthru
          _
        // Predicated region
        $region25: #{tpu_custom_call.1} parent=11 // pred_check
          %p193 = pneg %p129
        $region26: #{tpu_custom_call.1} parent=11 // pred_check_branch
          %195 = sbr.rel (%p193) target = $region28
        $region27: #{tpu_custom_call.1} parent=11 // pred_region
          _
        $region28: #{tpu_custom_call.1} parent=11 // pred_fallthru
          _
      $region12: #{tpu_custom_call.1} parent=5 // pred_fallthru
        _
      %p196 = scmp.lt.s32.totalorder %s19, 2
      // Predicated region
      $region29: #{tpu_custom_call.1} parent=5 // pred_check
        %p197 = pneg %p196
      $region30: #{tpu_custom_call.1} parent=5 // pred_check_branch
        %199 = sbr.rel (%p197) target = $region32
      $region31: #{tpu_custom_call.1} parent=5 // pred_region
        // Predicated region
        $region33: #{tpu_custom_call.1} parent=31 // pred_check
          %p200 = pneg %p81
        $region34: #{tpu_custom_call.1} parent=31 // pred_check_branch
          %202 = sbr.rel (%p200) target = $region36
        $region35: #{tpu_custom_call.1} parent=31 // pred_region
          %s203 = sand.u32 %s71, 1
          %s204 = scalar_lea.sflag [#allocation3], %s203
          %s205 = sand.u32 %s71, 1
          %s206 = smul.addr %s205, 32
          %s207 = scalar_lea.vmem [#allocation8], %s206
          %209 = vsyncadd %s204, 0
          %s210 = smul.addr %s19, 4
          %s211 = smul.addr %s210, 8
          %s212 = scalar_lea.hbm %s2, %s211
          %s213 = sshll.u32 %s212, 4
          %s214 = int_to_ptr.hbm [resolvable:$true] %s213
          %s215 = sshll.u32 %s207, 4
          %s216 = int_to_ptr.vmem [resolvable:$true] %s215
          %221 = dma.hbm_to_vmem [thread:$0]  %s214, 512, %s216, %s204, 128, 128, 8
        $region36: #{tpu_custom_call.1} parent=31 // pred_fallthru
          _
      $region32: #{tpu_custom_call.1} parent=5 // pred_fallthru
        _
      %p222 = scmp.le.s32.totalorder 1, %s19
      %p223 = scmp.lt.s32.totalorder %s19, 3
      %p224 = pnand %p222, %p223
      %p225 = pneg %p224
      // Predicated region
      $region37: #{tpu_custom_call.1} parent=5 // pred_check
        _
      $region38: #{tpu_custom_call.1} parent=5 // pred_check_branch
        %227 = sbr.rel (%p224) target = $region40
      $region39: #{tpu_custom_call.1} parent=5 // pred_region
        %s228 = ssub.s32 %s19, 1
        // Predicated region
        $region41: #{tpu_custom_call.1} parent=39 // pred_check
          %p229 = pneg %p40
        $region42: #{tpu_custom_call.1} parent=39 // pred_check_branch
          %231 = sbr.rel (%p229) target = $region44
        $region43: #{tpu_custom_call.1} parent=39 // pred_region
          %233 = dma.done [#allocation5], 16
        $region44: #{tpu_custom_call.1} parent=39 // pred_fallthru
          _
        // Predicated region
        $region45: #{tpu_custom_call.1} parent=39 // pred_check
          %p234 = pneg %p61
        $region46: #{tpu_custom_call.1} parent=39 // pred_check_branch
          %236 = sbr.rel (%p234) target = $region48
        $region47: #{tpu_custom_call.1} parent=39 // pred_region
          %238 = dma.done [#allocation7], 16
        $region48: #{tpu_custom_call.1} parent=39 // pred_fallthru
          _
        %s239 = sand.u32 %s74, 1
        %s240 = scalar_lea.sflag [#allocation3], %s239
        %s241 = sand.u32 %s74, 1
        %s242 = smul.addr %s241, 32
        %s243 = scalar_lea.vmem [#allocation8], %s242
        // Predicated region
        $region49: #{tpu_custom_call.1} parent=39 // pred_check
          %p244 = pneg %p87
        $region50: #{tpu_custom_call.1} parent=39 // pred_check_branch
          %246 = sbr.rel (%p244) target = $region52
        $region51: #{tpu_custom_call.1} parent=39 // pred_region
          %248 = dma.done %s240, 512
        $region52: #{tpu_custom_call.1} parent=39 // pred_fallthru
          _
        %249 = sfence
        %p250 = pneg %p40
        %p251 = pneg %p37
        %p252 = pneg %p61
        %p253 = pneg %p58
        %s254 = sand.u32 %s74, 1
        %s255 = scalar_lea.sflag [#allocation3], %s254
        %s256 = sand.u32 %s74, 1
        %s257 = smul.addr %s256, 32
        %s258 = scalar_lea.vmem [#allocation8], %s257
        %p259 = pneg %p87
        %p260 = pneg %p84
        %p261 = pneg %p108
        %p262 = pneg %p105
        %p263 = pneg %p129
        %p264 = pneg %p126
        %p265 = pneg %p155
        %p266 = pneg %p152
        %s267 = sand.u32 %s142, 1
        %s268 = scalar_lea.sflag [#allocation4], %s267
        %s269 = sand.u32 %s142, 1
        %s270 = smul.addr %s269, 32
        %s271 = scalar_lea.vmem [#allocation9], %s270
        %v272 = vld [vmem:[%s243] sm:$0xff]
        %v273 = vld [vmem:[%s243 + $0x8] sm:$0xff]
        %v274 = vld [vmem:[%s243 + $0x10] sm:$0xff]
        %v275 = vld [vmem:[%s243 + $0x18] sm:$0xff]
        %vm276 = vcmask 261120
        %v277 = vsel %vm276, %v272, 0.0
        %v278 = vsel %vm276, %v273, 0.0
        %v279 = vadd.f32 %v277, %v278
        %v280 = vsel %vm276, %v274, 0.0
        %v281 = vadd.f32 %v279, %v280
        %v282 = vsel %vm276, %v275, 0.0
        %v283 = vadd.f32 %v281, %v282
        %v284 = vrot.slane %v283, 4
        %v285 = vadd.f32 %v283, %v284
        %v286 = vrot.slane %v285, 2
        %v287 = vadd.f32 %v285, %v286
        %v288 = vrot.slane %v287, 1
        %v289 = vadd.f32 %v287, %v288
        %v290 = vrcp.pop 32.0
        %v291 = vmul.f32 32.0, %v290
        %v292 = vsub.f32 1.0, %v291
        %v293 = vmul.f32 %v290, %v292
        %v294 = vadd.f32 %v290, %v293
        %vm295 = vweird.f32 %v290
        %v296 = vsel %vm295, %v290, %v294
        %v297 = vmul.f32 %v289, %v296
        %v298 = vsub.f32 %v272, %v297
        %v299 = vsub.f32 %v273, %v297
        %v300 = vsub.f32 %v274, %v297
        %v301 = vsub.f32 %v275, %v297
        %v302 = vmul.f32 %v298, %v298
        %v303 = vmul.f32 %v299, %v299
        %v304 = vmul.f32 %v300, %v300
        %v305 = vmul.f32 %v301, %v301
        %v306 = vsel %vm276, %v302, 0.0
        %v307 = vsel %vm276, %v303, 0.0
        %v308 = vadd.f32 %v306, %v307
        %v309 = vsel %vm276, %v304, 0.0
        %v310 = vadd.f32 %v308, %v309
        %v311 = vsel %vm276, %v305, 0.0
        %v312 = vadd.f32 %v310, %v311
        %v313 = vrot.slane %v312, 4
        %v314 = vadd.f32 %v312, %v313
        %v315 = vrot.slane %v314, 2
        %v316 = vadd.f32 %v314, %v315
        %v317 = vrot.slane %v316, 1
        %v318 = vadd.f32 %v316, %v317
        %v319 = vrcp.pop 31.0
        %v320 = vmul.f32 31.0, %v319
        %v321 = vsub.f32 1.0, %v320
        %v322 = vmul.f32 %v319, %v321
        %v323 = vadd.f32 %v319, %v322
        %vm324 = vweird.f32 %v319
        %v325 = vsel %vm324, %v319, %v323
        %v326 = vmul.f32 %v318, %v325
        %v327 = vsel %vm276, %v297, 0.0
        %328 = vadd.xlane.f32.xlu0 %v327
        %v329 = vpop.xlane.xlu0 %328
        %v330 = vmul.f32 %v329, %v296
        %v331 = vmul.f32 %v297, %v297
        %v332 = vadd.f32 %v326, %v331
        %v333 = vsel %vm276, %v332, 0.0
        %334 = vadd.xlane.f32.xlu0 %v333
        %v335 = vpop.xlane.xlu0 %334
        %v336 = vmul.f32 %v335, %v296
        %v337 = vmul.f32 %v330, %v330
        %v338 = vsub.f32 %v336, %v337
        %s339 = sld [smem:[#allocation2]]
        %s340 = sld [smem:[#allocation2 + $0x1]]
        %s341 = sld [smem:[#allocation6]]
        %s342 = sld [smem:[#allocation6 + $0x1]]
        %v343 = vstv %s339
        %v344 = vmul.f32 %v343, %v297
        %v345 = vstv %s340
        %v346 = vmul.f32 %v345, %v330
        %v347 = vadd.f32 %v344, %v346
        %v348 = vstv %s341
        %v349 = vmul.f32 %v348, %v326
        %v350 = vstv %s342
        %v351 = vmul.f32 %v350, %v338
        %v352 = vadd.f32 %v349, %v351
        %v353 = vadd.f32 %v352, 1e-05
        %v354 = vrsqrt.pop %v353
        %v355 = vmul.f32 %v354, %v353
        %v356 = vmul.f32 %v355, %v354
        %v357 = vmul.f32 0.5, %v356
        %v358 = vsub.f32 1.5, %v357
        %v359 = vmul.f32 %v354, %v358
        %vm360 = vweird.f32 %v353
        %vm361 = vweird.f32 %v354
        %vm362 = vmor %vm360, %vm361
        %v363 = vsel %vm362, %v354, %v359
        %v364 = vsub.f32 %v272, %v347
        %v365 = vsub.f32 %v273, %v347
        %v366 = vsub.f32 %v274, %v347
        %v367 = vsub.f32 %v275, %v347
        %v368 = vmul.f32 %v364, %v363
        %v369 = vmul.f32 %v365, %v363
        %v370 = vmul.f32 %v366, %v363
        %v371 = vmul.f32 %v367, %v363
        %v372 = vld [vmem:[%s3] sm:$0x1]
        %v374 = vperm.slane %v372, 0
        %v376 = vmul.f32 %v368, %v374
        %v377 = vmul.f32 %v369, %v374
        %v378 = vmul.f32 %v370, %v374
        %v379 = vmul.f32 %v371, %v374
        %v380 = vld [vmem:[%s4] sm:$0x1]
        %v382 = vperm.slane %v380, 0
        %v384 = vadd.f32 %v376, %v382
        %v385 = vadd.f32 %v377, %v382
        %v386 = vadd.f32 %v378, %v382
        %v387 = vadd.f32 %v379, %v382
        %388 = vst.msk [vmem:[%s271] sm:$0xff] %vm276, %v384
        %389 = vst.msk [vmem:[%s271 + $0x8] sm:$0xff] %vm276, %v385
        %390 = vst.msk [vmem:[%s271 + $0x10] sm:$0xff] %vm276, %v386
        %391 = vst.msk [vmem:[%s271 + $0x18] sm:$0xff] %vm276, %v387
        %s392 = sand.u32 %s142, 1
        %s393 = scalar_lea.sflag [#allocation4], %s392
        %s394 = sand.u32 %s142, 1
        %s395 = smul.addr %s394, 32
        %s396 = scalar_lea.vmem [#allocation9], %s395
        // Predicated region
        $region53: #{tpu_custom_call.1} parent=39 // pred_check
          %p397 = pneg %p152
        $region54: #{tpu_custom_call.1} parent=39 // pred_check_branch
          %399 = sbr.rel (%p397) target = $region56
        $region55: #{tpu_custom_call.1} parent=39 // pred_region
          %401 = vsyncadd %s393, 0
          %s402 = smul.addr %s24, 4
          %s403 = smul.addr %s402, 8
          %s404 = scalar_lea.hbm %s5, %s403
          %s405 = sshll.u32 %s396, 4
          %s406 = int_to_ptr.vmem [resolvable:$true] %s405
          %s407 = sshll.u32 %s404, 4
          %s408 = int_to_ptr.hbm [resolvable:$true] %s407
          %413 = dma.vmem_to_hbm [thread:$0]  %s406, 512, %s408, %s393, 128, 128, 8
        $region56: #{tpu_custom_call.1} parent=39 // pred_fallthru
          _
      $region40: #{tpu_custom_call.1} parent=5 // pred_fallthru
        _
      %p414 = scmp.le.s32.totalorder 2, %s19
      // Predicated region
      $region57: #{tpu_custom_call.1} parent=5 // pred_check
        %p415 = pneg %p414
      $region58: #{tpu_custom_call.1} parent=5 // pred_check_branch
        %417 = sbr.rel (%p415) target = $region60
      $region59: #{tpu_custom_call.1} parent=5 // pred_region
        %s418 = ssub.s32 %s19, 2
        // Predicated region
        $region61: #{tpu_custom_call.1} parent=59 // pred_check
          %p419 = pneg %p158
        $region62: #{tpu_custom_call.1} parent=59 // pred_check_branch
          %421 = sbr.rel (%p419) target = $region64
        $region63: #{tpu_custom_call.1} parent=59 // pred_region
          %s422 = sand.u32 %s143, 1
          %s423 = scalar_lea.sflag [#allocation4], %s422
          %s424 = sand.u32 %s143, 1
          %s425 = smul.addr %s424, 32
          %s426 = scalar_lea.vmem [#allocation9], %s425
          %428 = dma.done %s423, 512
        $region64: #{tpu_custom_call.1} parent=59 // pred_fallthru
          _
      $region60: #{tpu_custom_call.1} parent=5 // pred_fallthru
        _
    $region6: #{tpu_custom_call.1} parent=1 // loop_footer
      %s23 = sadd.s32 1, %s19
    $region7: #{tpu_custom_call.1} parent=1 // loop_footer_branch
      %18 = sbr.rel target = $region3
    $region8: #{tpu_custom_call.1} parent=1 // loop_exit
      _
    %429 = vsyncpa [#allocation3], 1
    %s430 = scalar_lea.sflag [#allocation3], 1
    %431 = vsyncpa %s430, 1
    %432 = vsyncpa [#allocation4], 1
    %s433 = scalar_lea.sflag [#allocation4], 1
    %434 = vsyncpa %s433, 1
    %435 = vsyncpa [#allocation5], 1
    %s436 = scalar_lea.sflag [#allocation5], 1
    %437 = vsyncpa %s436, 1
    %438 = vsyncpa [#allocation7], 1

</llo_original>
